<compile_context>
chip_gen: v5e
topology: v5e:2x2
jax: 0.10.0
libtpu: 0.0.40
codegen_flags: <defaults>
</compile_context>

<pallas_src>
import math

import jax
import jax.numpy as jnp
from jax.experimental import pallas as pl
from jax.experimental.pallas import tpu as pltpu

_LANES = 128
_MIN_STEPS = 8                        # pipeline depth + 2-TC megacore sharding
_SQRT_2_OVER_PI = math.sqrt(2.0 / math.pi)   # folded at trace time


# --------------------------------------------------------------------------
# Kernel body
# --------------------------------------------------------------------------
def _gelu_kernel(x_ref, o_ref):
    x = x_ref[...]
    xf = x.astype(jnp.float32)                        # no-op for f32 inputs
    inner = _SQRT_2_OVER_PI * xf * (1.0 + 0.044715 * xf * xf)
    # jnp.tanh lowers to a single EUP transcendental (free slot vs VALU) on
    # TPU, keeping this kernel HBM-bound on all generations.
    o_ref[...] = (0.5 * xf * (1.0 + jnp.tanh(inner))).astype(o_ref.dtype)


def _gelu_jnp(x):
    """Plain-jnp GELU for the <128-element ragged tail / tiny inputs."""
    xf = x.astype(jnp.float32)
    inner = _SQRT_2_OVER_PI * xf * (1.0 + 0.044715 * xf * xf)
    return (0.5 * xf * (1.0 + jnp.tanh(inner))).astype(x.dtype)


# --------------------------------------------------------------------------
# Tiling helpers
# --------------------------------------------------------------------------
def _vmem_capacity_bytes() -> int:
    try:
        info = pltpu.get_tpu_info()
        cap = getattr(info, "vmem_capacity_bytes", None)
        if cap:
            return int(cap)
    except Exception:
        pass
    return 64 << 20   # conservative fallback: v7x per-TensorCore VMEM


def _choose_row_tile(rows: int, itemsize: int, block_f32_bytes: int) -> int:
    """Row-tile for a (rows, 128) slab.

    Sized off the f32 compute footprint (max(itemsize, 4)).  Keeps at least
    _MIN_STEPS grid steps so the DMA pipeline stays full and both v7x
    TensorCores get work; prefers an even step count (no 2:1 core imbalance).
    """
    if rows <= 8:
        return rows                       # block == full array dim (allowed)
    itemsize_eff = max(itemsize, 4)       # in-kernel compute is f32
    target_rt = max(8, ((block_f32_bytes // (_LANES * itemsize_eff)) // 8) * 8)
    cap = max(8, ((rows // _MIN_STEPS) // 8) * 8)
    rt = min(target_rt, cap)
    steps = -(-rows // rt)
    if steps >= 3 and steps % 2 == 1:
        rt_even = max(8, ((-(-rows // (steps + 1)) + 7) // 8) * 8)
        if (-(-rows // rt_even)) % 2 == 0:
            rt = rt_even
    return rt


def _make_in_spec(rt: int, deep: bool) -> pl.BlockSpec:
    if deep:
        try:
            return pl.BlockSpec((rt, _LANES), lambda i: (i, 0),
                                pipeline_mode=pl.Buffered(3))
        except Exception:
            pass   # older jax without pipeline_mode: fall back to default 2-deep
    return pl.BlockSpec((rt, _LANES), lambda i: (i, 0))


# --------------------------------------------------------------------------
# Public wrapper
# --------------------------------------------------------------------------
def gelu(x: jax.Array, donate: bool = False) -> jax.Array:
    orig_shape = x.shape
    total = x.size
    if total == 0:
        return x

    x_flat = jnp.ravel(x)
    aligned = (total // _LANES) * _LANES

    if aligned == 0:
        # Tiny input (<128 elements): not worth a kernel launch.
        return _gelu_jnp(x_flat).reshape(orig_shape)

    rows = aligned // _LANES
    if aligned == total:
        x2d = x_flat.reshape(rows, _LANES)
    else:
        x2d = x_flat[:aligned].reshape(rows, _LANES)

    itemsize = jnp.dtype(x.dtype).itemsize
    vmem_cap = _vmem_capacity_bytes()
    big_vmem = vmem_cap >= (96 << 20)               # v5e/v6e: 128 MiB; v7x: 64 MiB
    block_f32_bytes = (8 << 20) if big_vmem else (6 << 20)

    rt = _choose_row_tile(rows, itemsize, block_f32_bytes)
    grid = (pl.cdiv(rows, rt),)                      # partial last block is masked
    vmem_limit = min(max(32 << 20, vmem_cap - (16 << 20)), vmem_cap)

    out2d = pl.pallas_call(
        _gelu_kernel,
        out_shape=jax.ShapeDtypeStruct((rows, _LANES), x.dtype),
        grid_spec=pltpu.PrefetchScalarGridSpec(
            num_scalar_prefetch=0,
            grid=grid,
            in_specs=[_make_in_spec(rt, deep=big_vmem)],
            out_specs=pl.BlockSpec((rt, _LANES), lambda i: (i, 0)),
        ),
        compiler_params=pltpu.CompilerParams(
            dimension_semantics=("parallel",),
            vmem_limit_bytes=int(vmem_limit),
        ),
        input_output_aliases=({0: 0} if donate else {}),
    )(x2d)

    out_flat = out2d.reshape(-1)
    if aligned != total:
        # <128-element tail: tiny fused jnp expression, no padded full-array copy.
        out_flat = jnp.concatenate([out_flat, _gelu_jnp(x_flat[aligned:])])
    return out_flat.reshape(orig_shape)


# --------------------------------------------------------------------------
# Reference + self-test
# --------------------------------------------------------------------------
def gelu_ref(x):
    xf = x.astype(jnp.float32)
    y = 0.5 * xf * (1.0 + jnp.tanh(jnp.sqrt(2.0 / jnp.pi)
                                   * (xf + 0.044715 * jnp.power(xf, 3))))
    return y.astype(x.dtype)


if __name__ == "__main__":
    key = jax.random.PRNGKey(0)

    # Case 1: NCHW activation, C*H*W multiple of 128 -> fully aligned path.
    x = jax.random.normal(key, (2, 4, 16, 16), dtype=jnp.float32)
    y = gelu(x)
    jax.block_until_ready(y)
    assert y.shape == x.shape and y.dtype == x.dtype
    assert jnp.allclose(y, gelu_ref(x), atol=1e-5, rtol=1e-5), \
        "mismatch vs reference (aligned)"

    # Case 2: ragged size (not a multiple of 128) -> aligned prefix + jnp tail.
    x2 = jax.random.normal(jax.random.PRNGKey(1), (3, 5, 7, 11), dtype=jnp.float32)
    y2 = gelu(x2)
    jax.block_until_ready(y2)
    assert y2.shape == x2.shape and y2.dtype == x2.dtype
    assert jnp.allclose(y2, gelu_ref(x2), atol=1e-5, rtol=1e-5), \
        "mismatch vs reference (ragged)"

    # Case 3: tiny input (<128 elements) -> pure-jnp fast path.
    x3 = jax.random.normal(jax.random.PRNGKey(2), (3, 5), dtype=jnp.float32)
    y3 = gelu(x3)
    jax.block_until_ready(y3)
    assert jnp.allclose(y3, gelu_ref(x3), atol=1e-5, rtol=1e-5), \
        "mismatch vs reference (tiny)"

    print("KERNEL_OK")
</pallas_src>

<mosaic_0001>
module attributes {stable_mosaic.version = 11 : i64} {
  func.func @_gelu_kernel(%arg0: i32, %arg1: memref<8x128xf32, #tpu.memory_space<vmem>>, %arg2: memref<8x128xf32, #tpu.memory_space<vmem>>) attributes {dimension_semantics = [#tpu.dimension_semantics<parallel>], iteration_bounds = array<i64: 2>, scalar_prefetch = 0 : i64, scratch_operands = 0 : i64, tpu.core_type = #tpu.core_type<tc>, window_params = [{transform_indices = @transform_0, window_bounds = array<i64: 8, 128>}, {transform_indices = @transform_1, window_bounds = array<i64: 8, 128>}]} {
    %c0 = arith.constant 0 : index
    %c0_0 = arith.constant 0 : index
    %0 = vector.load %arg1[%c0, %c0_0] : memref<8x128xf32, #tpu.memory_space<vmem>>, vector<8x128xf32>
    %cst = arith.constant 0.797884583 : f32
    %1 = vector.broadcast %cst : f32 to vector<8x128xf32>
    %2 = arith.mulf %1, %0 : vector<8x128xf32>
    %cst_1 = arith.constant 4.471500e-02 : f32
    %3 = vector.broadcast %cst_1 : f32 to vector<8x128xf32>
    %4 = arith.mulf %3, %0 : vector<8x128xf32>
    %5 = arith.mulf %4, %0 : vector<8x128xf32>
    %cst_2 = arith.constant 1.000000e+00 : f32
    %6 = vector.broadcast %cst_2 : f32 to vector<8x128xf32>
    %7 = arith.addf %6, %5 : vector<8x128xf32>
    %8 = arith.mulf %2, %7 : vector<8x128xf32>
    %cst_3 = arith.constant 5.000000e-01 : f32
    %9 = vector.broadcast %cst_3 : f32 to vector<8x128xf32>
    %10 = arith.mulf %9, %0 : vector<8x128xf32>
    %11 = math.tanh %8 : vector<8x128xf32>
    %cst_4 = arith.constant 1.000000e+00 : f32
    %12 = vector.broadcast %cst_4 : f32 to vector<8x128xf32>
    %13 = arith.addf %12, %11 : vector<8x128xf32>
    %14 = arith.mulf %10, %13 : vector<8x128xf32>
    %c0_5 = arith.constant 0 : index
    %c0_6 = arith.constant 0 : index
    %15 = vector.load %arg2[%c0_5, %c0_6] : memref<8x128xf32, #tpu.memory_space<vmem>>, vector<8x128xf32>
    tpu.vector_store %arg2[%c0_5, %c0_6], %14 {strides = array<i32>} : memref<8x128xf32, #tpu.memory_space<vmem>>, vector<8x128xf32>,
    return
  }
  func.func @transform_0(%arg0: i32) -> (i32, i32) {
    %c0_i32 = arith.constant 0 : i32
    %c0_i32_0 = arith.constant 0 : i32
    return %arg0, %c0_i32 : i32, i32
  }
  func.func @transform_1(%arg0: i32) -> (i32, i32) {
    %c0_i32 = arith.constant 0 : i32
    %c0_i32_0 = arith.constant 0 : i32
    return %arg0, %c0_i32 : i32, i32
  }
}

</mosaic_0001>

<llo_original>
// kernel: tpu_custom_call.1
$region0: #{tpu_custom_call.1}
  #allocation0 [shape = 'u32[]', space=smem, size = 0x4, offset = 0x4, fixed_abs, tag = 'smem constant byte address 0x4 - core index']
  #allocation1 [shape = 'u32[72,128]{1,0:T(1,128)}', space=vmem, size = 0x9000, scoped, tag = 'internal scratch']
  %s0 = inlined_call_operand.hbm [shape: f32[16,128], index: 0, kind: input, shape index: {}]
  %s1 = inlined_call_operand.hbm [shape: f32[16,128], index: 1, kind: output, shape index: {}]
  %s2 = sld [smem:[#allocation0]]
  $region41: #{tpu_custom_call.1} parent=0
    _
  %s4 = ssub.s32 1, %s2
  %s5 = scalar_select 0, %s4, %s2
  $region1: #{tpu_custom_call.1} parent=0
    #allocation2 [shape = 'u8[8192]{0}', space=vmem, size = 0x2000, scoped, tag = 'input window, operand 0']
    #allocation3 [shape = 's32[2]{0}', space=sflag, size = 0x8, scoped, tag = 'scoped memory for tpu_custom_call.1']
    #allocation4 [shape = 's32[2]{0}', space=sflag, size = 0x8, scoped, tag = 'scoped memory for tpu_custom_call.1']
    #allocation5 [shape = 'u8[8192]{0}', space=vmem, size = 0x2000, scoped, tag = 'output window, operand 0']
    %6 = vsyncpa [#allocation3], 0
    %s7 = scalar_lea.sflag [#allocation3], 1
    %8 = vsyncpa %s7, 0
    %9 = vsyncpa [#allocation4], 0
    %s10 = scalar_lea.sflag [#allocation4], 1
    %11 = vsyncpa %s10, 0
    loop: start=0, step=1, limit=4
    $region2: #{tpu_custom_call.1} parent=1 // loop_pre_header
      _
    $region3: #{tpu_custom_call.1} parent=1 // loop_header
      %s13 = sphi 0, %s17
      %p14 = scmp.ge.s32.totalorder %s13, 4
      %s23 = sphi 0, %s25
      %s26 = sphi 0, %s23
      %s27 = sphi 0, %s26
      %s43 = sphi 0, %s27
      %s49 = sphi 0, %s51
      %s52 = sphi 0, %s49
      %s53 = sphi 0, %s52
      %s69 = sphi 0, %s53
    $region4: #{tpu_custom_call.1} parent=1 // loop_header_branch
      %16 = sbr.rel (%p14) target = $region8
    $region5: #{tpu_custom_call.1} parent=1 // loop_body
      %s18 = ssub.s32 %s13, 1
      %s19 = ssub.s32 %s13, 2
      %s20 = sadd.s32 %s13, 1
      %s21 = ssub.s32 %s13, %s20
      %p22 = scmp.eq.s32.totalorder %s21, 0
      %s24 = sadd.s32 %s23, 1
      %s25 = scalar_select %p22, %s23, %s24
      %p28 = pneg %p22
      %p29 = scmp.eq.s32.totalorder %s13, 1
      %p30 = por %p28, %p29
      %p31 = scmp.ne.s32.totalorder %s23, %s26
      %p32 = scmp.eq.s32.totalorder %s13, 0
      %p33 = por %p31, %p32
      %p34 = scmp.ne.s32.totalorder %s23, %s26
      %p35 = scmp.eq.s32.totalorder %s18, 1
      %p36 = por %p34, %p35
      %p37 = scmp.ne.s32.totalorder %s26, %s27
      %p38 = scmp.eq.s32.totalorder %s18, 0
      %p39 = por %p37, %p38
      %p40 = scmp.ne.s32.totalorder %s26, %s27
      %p41 = scmp.eq.s32.totalorder %s19, 1
      %p42 = por %p40, %p41
      %p44 = scmp.ne.s32.totalorder %s27, %s43
      %p45 = scmp.eq.s32.totalorder %s19, 0
      %p46 = por %p44, %p45
      %s47 = ssub.s32 %s13, %s20
      %p48 = scmp.eq.s32.totalorder %s47, 0
      %s50 = sadd.s32 %s49, 1
      %s51 = scalar_select %p48, %s49, %s50
      %p54 = pneg %p48
      %p55 = scmp.eq.s32.totalorder %s13, 1
      %p56 = por %p54, %p55
      %p57 = scmp.ne.s32.totalorder %s49, %s52
      %p58 = scmp.eq.s32.totalorder %s13, 0
      %p59 = por %p57, %p58
      %p60 = scmp.ne.s32.totalorder %s49, %s52
      %p61 = scmp.eq.s32.totalorder %s18, 1
      %p62 = por %p60, %p61
      %p63 = scmp.ne.s32.totalorder %s52, %s53
      %p64 = scmp.eq.s32.totalorder %s18, 0
      %p65 = por %p63, %p64
      %p66 = scmp.ne.s32.totalorder %s52, %s53
      %p67 = scmp.eq.s32.totalorder %s19, 1
      %p68 = por %p66, %p67
      %p70 = scmp.ne.s32.totalorder %s53, %s69
      %p71 = scmp.eq.s32.totalorder %s19, 0
      %p72 = por %p70, %p71
      %p73 = scmp.le.s32.totalorder 1, %s13
      %p74 = scmp.lt.s32.totalorder %s13, 3
      %p75 = pnand %p73, %p74
      %p76 = pneg %p75
      // Predicated region
      $region9: #{tpu_custom_call.1} parent=5 // pred_check
        _
      $region10: #{tpu_custom_call.1} parent=5 // pred_check_branch
        %78 = sbr.rel (%p75) target = $region12
      $region11: #{tpu_custom_call.1} parent=5 // pred_region
        %s79 = ssub.s32 %s13, 1
      $region12: #{tpu_custom_call.1} parent=5 // pred_fallthru
        _
      %p80 = scmp.lt.s32.totalorder %s13, 2
      // Predicated region
      $region13: #{tpu_custom_call.1} parent=5 // pred_check
        %p81 = pneg %p80
      $region14: #{tpu_custom_call.1} parent=5 // pred_check_branch
        %83 = sbr.rel (%p81) target = $region16
      $region15: #{tpu_custom_call.1} parent=5 // pred_region
        // Predicated region
        $region17: #{tpu_custom_call.1} parent=15 // pred_check
          %p84 = pneg %p33
        $region18: #{tpu_custom_call.1} parent=15 // pred_check_branch
          %86 = sbr.rel (%p84) target = $region20
        $region19: #{tpu_custom_call.1} parent=15 // pred_region
          %s87 = sand.u32 %s23, 1
          %s88 = scalar_lea.sflag [#allocation3], %s87
          %s89 = sand.u32 %s23, 1
          %s90 = smul.addr %s89, 8
          %s91 = scalar_lea.vmem [#allocation2], %s90
          %93 = vsyncadd %s88, 0
          %s94 = smul.addr %s13, 8
          %s95 = scalar_lea.hbm %s0, %s94
          %s97 = sshll.u32 %s95, 4
          %s98 = int_to_ptr.hbm [resolvable:$true] %s97
          %s99 = sshll.u32 %s91, 4
          %s100 = int_to_ptr.vmem [resolvable:$true] %s99
          %102 = dma.hbm_to_vmem [thread:$0]  %s98, 128, %s100, %s88
        $region20: #{tpu_custom_call.1} parent=15 // pred_fallthru
          _
      $region16: #{tpu_custom_call.1} parent=5 // pred_fallthru
        _
      %p103 = scmp.le.s32.totalorder 1, %s13
      %p104 = scmp.lt.s32.totalorder %s13, 3
      %p105 = pnand %p103, %p104
      %p106 = pneg %p105
      // Predicated region
      $region21: #{tpu_custom_call.1} parent=5 // pred_check
        _
      $region22: #{tpu_custom_call.1} parent=5 // pred_check_branch
        %108 = sbr.rel (%p105) target = $region24
      $region23: #{tpu_custom_call.1} parent=5 // pred_region
        %s109 = ssub.s32 %s13, 1
        %s110 = sand.u32 %s26, 1
        %s111 = scalar_lea.sflag [#allocation3], %s110
        %s112 = sand.u32 %s26, 1
        %s113 = smul.addr %s112, 8
        %s114 = scalar_lea.vmem [#allocation2], %s113
        // Predicated region
        $region25: #{tpu_custom_call.1} parent=23 // pred_check
          %p115 = pneg %p39
        $region26: #{tpu_custom_call.1} parent=23 // pred_check_branch
          %117 = sbr.rel (%p115) target = $region28
        $region27: #{tpu_custom_call.1} parent=23 // pred_region
          %119 = dma.done %s111, 128
        $region28: #{tpu_custom_call.1} parent=23 // pred_fallthru
          _
        %s120 = sand.u32 %s26, 1
        %s121 = scalar_lea.sflag [#allocation3], %s120
        %s122 = sand.u32 %s26, 1
        %s123 = smul.addr %s122, 8
        %s124 = scalar_lea.vmem [#allocation2], %s123
        %p125 = pneg %p39
        %p126 = pneg %p36
        %p127 = pneg %p65
        %p128 = pneg %p62
        %s129 = sand.u32 %s52, 1
        %s130 = scalar_lea.sflag [#allocation4], %s129
        %s131 = sand.u32 %s52, 1
        %s132 = smul.addr %s131, 8
        %s133 = scalar_lea.vmem [#allocation5], %s132
        %v134 = vld [vmem:[%s114] sm:$0xff]
        %v135 = vmul.f32 %v134, 0.7978846
        %v136 = vmul.f32 %v134, 0.044715
        %v137 = vmul.f32 %v136, %v134
        %v138 = vadd.f32 %v137, 1.0
        %v139 = vmul.f32 %v135, %v138
        %v140 = vmul.f32 %v134, 0.5
        %v141 = vtanh.pop %v139
        %v142 = vadd.f32 %v141, 1.0
        %v143 = vmul.f32 %v140, %v142
        %144 = vst [vmem:[%s133] sm:$0xff] %v143
        %s145 = sand.u32 %s52, 1
        %s146 = scalar_lea.sflag [#allocation4], %s145
        %s147 = sand.u32 %s52, 1
        %s148 = smul.addr %s147, 8
        %s149 = scalar_lea.vmem [#allocation5], %s148
        // Predicated region
        $region29: #{tpu_custom_call.1} parent=23 // pred_check
          %p150 = pneg %p62
        $region30: #{tpu_custom_call.1} parent=23 // pred_check_branch
          %152 = sbr.rel (%p150) target = $region32
        $region31: #{tpu_custom_call.1} parent=23 // pred_region
          %154 = vsyncadd %s146, 0
          %s155 = smul.addr %s18, 8
          %s156 = scalar_lea.hbm %s1, %s155
          %s158 = sshll.u32 %s149, 4
          %s159 = int_to_ptr.vmem [resolvable:$true] %s158
          %s160 = sshll.u32 %s156, 4
          %s161 = int_to_ptr.hbm [resolvable:$true] %s160
          %163 = dma.vmem_to_hbm [thread:$0]  %s159, 128, %s161, %s146
        $region32: #{tpu_custom_call.1} parent=23 // pred_fallthru
          _
      $region24: #{tpu_custom_call.1} parent=5 // pred_fallthru
        _
      %p164 = scmp.le.s32.totalorder 2, %s13
      // Predicated region
      $region33: #{tpu_custom_call.1} parent=5 // pred_check
        %p165 = pneg %p164
      $region34: #{tpu_custom_call.1} parent=5 // pred_check_branch
        %167 = sbr.rel (%p165) target = $region36
      $region35: #{tpu_custom_call.1} parent=5 // pred_region
        %s168 = ssub.s32 %s13, 2
        // Predicated region
        $region37: #{tpu_custom_call.1} parent=35 // pred_check
          %p169 = pneg %p68
        $region38: #{tpu_custom_call.1} parent=35 // pred_check_branch
          %171 = sbr.rel (%p169) target = $region40
        $region39: #{tpu_custom_call.1} parent=35 // pred_region
          %s172 = sand.u32 %s53, 1
          %s173 = scalar_lea.sflag [#allocation4], %s172
          %s174 = sand.u32 %s53, 1
          %s175 = smul.addr %s174, 8
          %s176 = scalar_lea.vmem [#allocation5], %s175
          %178 = dma.done %s173, 128
        $region40: #{tpu_custom_call.1} parent=35 // pred_fallthru
          _
      $region36: #{tpu_custom_call.1} parent=5 // pred_fallthru
        _
    $region6: #{tpu_custom_call.1} parent=1 // loop_footer
      %s17 = sadd.s32 1, %s13
    $region7: #{tpu_custom_call.1} parent=1 // loop_footer_branch
      %12 = sbr.rel target = $region3
    $region8: #{tpu_custom_call.1} parent=1 // loop_exit
      _
    %179 = vsyncpa [#allocation3], 1
    %s180 = scalar_lea.sflag [#allocation3], 1
    %181 = vsyncpa %s180, 1
    %182 = vsyncpa [#allocation4], 1
    %s183 = scalar_lea.sflag [#allocation4], 1
    %184 = vsyncpa %s183, 1

</llo_original>
